<compile_context>
chip_gen: v7x
topology: tpu7x:2x2x1
jax: 0.10.0
libtpu: 0.0.40
codegen_flags: <defaults>
</compile_context>

<pallas_src>
import jax
import jax.numpy as jnp
from jax import lax
from jax.experimental import pallas as pl
from jax.experimental.pallas import tpu as pltpu

_LOG2_E = 1.4426950408889634  # 1 / ln(2)

# Per-input block target. 2 inputs x 2 pipeline buffers (+ output buffers in the
# no-sum path) stays well inside every generation's VMEM (64 MiB on v7x), while
# the per-grid-step DMA window stays >> the ~0.35 us fixed step cost even at
# v7x's ~3.2 TB/s HBM.
_TARGET_BLOCK_BYTES = 4 << 20


def _round_up(x, k):
    return (x + k - 1) // k * k


def _vmem_capacity_bytes():
    try:
        return int(pltpu.get_tpu_info().vmem_capacity_bytes)
    except Exception:  # pragma: no cover - conservative fallback off-TPU/older jax
        return 64 << 20  # most constrained generation (v7x per-TC)


def _choose_tiles(n, m, itemsize, tile_n, tile_m, target=_TARGET_BLOCK_BYTES):
    """Sublane/lane-aligned tiles with block bytes bounded by `target`."""
    sub = max(8, 32 // itemsize)  # sublane packing: 8 for f32, 16 for bf16
    lane = 128
    if tile_m is None:
        if m * itemsize * sub <= target:
            # A sublane-group of full rows fits the budget -> keep full rows
            # (no column masking, single reduction step in the sum path).
            tile_m = m
        else:
            cols = max(lane, (target // (sub * itemsize)) // lane * lane)
            tile_m = min(_round_up(m, lane), cols)
    assert tile_m == m or tile_m % lane == 0, (
        "tile_m must equal m or be a multiple of 128")

    if tile_n is None:
        rows = max(sub, (target // max(1, tile_m * itemsize)) // sub * sub)
        tile_n = min(rows, _round_up(n, sub))
        # Megacore (v7x): keep >= 2 grid steps along the parallel row axis so
        # both TensorCores get work, whenever n can actually be split.
        if tile_n >= n and n > sub:
            tile_n = _round_up(pl.cdiv(n, 2), sub)
    assert tile_n == n or tile_n % sub == 0, (
        f"tile_n must equal n or be a multiple of the sublane packing ({sub})")
    return tile_n, tile_m


def _make_sum_kernel(tile_m, m_true, need_col_mask):
    """Row-wise -sum_m p*log2(q), accumulated over the (last) column grid axis."""

    def kernel(p_ref, q_ref, o_ref, acc_ref):
        j = pl.program_id(1)

        @pl.when(j == 0)
        def _():
            acc_ref[...] = jnp.zeros_like(acc_ref)

        p = p_ref[...].astype(jnp.float32)
        q = q_ref[...].astype(jnp.float32)
        # Hoist 1/ln(2) out of the reduction: accumulate sum_m p*ln(q), scale once.
        prod = p * jnp.log(q)
        if need_col_mask:
            # Ragged column edge: zero the contribution of out-of-bounds lanes
            # (select, so any NaN/Inf from garbage edge data cannot leak).
            col = lax.broadcasted_iota(jnp.int32, prod.shape, 1)
            prod = jnp.where(j * tile_m + col < m_true, prod, 0.0)
        acc_ref[...] += jnp.sum(prod, axis=1, keepdims=True)

        @pl.when(j == pl.num_programs(1) - 1)
        def _():
            o_ref[...] = (-_LOG2_E * acc_ref[...]).astype(o_ref.dtype)

    return kernel


def _nosum_kernel(p_ref, q_ref, o_ref):
    """Pure elementwise -p*log2(q). Edge blocks: OOB lanes never written back."""
    p = p_ref[...].astype(jnp.float32)
    q = q_ref[...].astype(jnp.float32)
    o_ref[...] = (-p * jnp.log2(q)).astype(o_ref.dtype)


def cont_cross_entropy(p, q, sumit=True, tile_n=None, tile_m=None):
    """Pallas port of ContCrossEntropy.forward(p, q).

    p, q: (n, m) float arrays (each row a probability distribution).
    Returns (n,) if sumit else (n, m), same dtype as p.
    """
    assert p.shape == q.shape and p.ndim == 2
    n, m = p.shape
    out_dtype = p.dtype
    itemsize = jnp.dtype(p.dtype).itemsize
    out_itemsize = jnp.dtype(out_dtype).itemsize
    tile_n, tile_m = _choose_tiles(n, m, itemsize, tile_n, tile_m)

    grid = (pl.cdiv(n, tile_n), pl.cdiv(m, tile_m))
    in_specs = [
        pl.BlockSpec((tile_n, tile_m), lambda i, j: (i, j)),
        pl.BlockSpec((tile_n, tile_m), lambda i, j: (i, j)),
    ]
    block_bytes = tile_n * tile_m * itemsize
    cap = _vmem_capacity_bytes()

    if sumit:
        need_col_mask = (tile_m != m) and (m % tile_m != 0)
        kernel = _make_sum_kernel(tile_m, m, need_col_mask)
        # 2 inputs x 2 buffers + narrow (lane-padded) output buffers + f32 acc.
        needed = 2 * 2 * block_bytes + 3 * tile_n * 128 * 4
        limit = int(min(0.7 * cap, max(16 << 20, int(1.5 * needed))))
        out = pl.pallas_call(
            kernel,
            out_shape=jax.ShapeDtypeStruct((n, 1), out_dtype),
            grid_spec=pltpu.PrefetchScalarGridSpec(
                num_scalar_prefetch=0,
                grid=grid,
                in_specs=in_specs,
                # Output block independent of the (last, reduction) column axis:
                # it stays resident in VMEM while j sweeps (accumulator pattern).
                out_specs=pl.BlockSpec((tile_n, 1), lambda i, j: (i, 0)),
                scratch_shapes=[pltpu.VMEM((tile_n, 1), jnp.float32)],
            ),
            compiler_params=pltpu.CompilerParams(
                dimension_semantics=("parallel", "arbitrary"),
                vmem_limit_bytes=limit,
            ),
            cost_estimate=pl.CostEstimate(
                flops=2 * n * m,
                transcendentals=n * m,
                bytes_accessed=2 * n * m * itemsize + n * out_itemsize,
            ),
        )(p, q)
        return out.reshape(n)
    else:
        needed = 2 * 2 * block_bytes + 2 * tile_n * tile_m * out_itemsize
        limit = int(min(0.7 * cap, max(16 << 20, int(1.5 * needed))))
        out = pl.pallas_call(
            _nosum_kernel,
            out_shape=jax.ShapeDtypeStruct((n, m), out_dtype),
            grid_spec=pltpu.PrefetchScalarGridSpec(
                num_scalar_prefetch=0,
                grid=grid,
                in_specs=in_specs,
                out_specs=pl.BlockSpec((tile_n, tile_m), lambda i, j: (i, j)),
            ),
            compiler_params=pltpu.CompilerParams(
                dimension_semantics=("parallel", "parallel"),
                vmem_limit_bytes=limit,
            ),
            cost_estimate=pl.CostEstimate(
                flops=2 * n * m,
                transcendentals=n * m,
                bytes_accessed=(2 * itemsize + out_itemsize) * n * m,
            ),
        )(p, q)
        return out


if __name__ == "__main__":
    key = jax.random.PRNGKey(0)
    kp, kq = jax.random.split(key)

    # Small deterministic example: n=8 samples, m=32-way distributions.
    n, m = 8, 32
    p = jax.nn.softmax(jax.random.normal(kp, (n, m), dtype=jnp.float32), axis=1)
    q = jax.nn.softmax(jax.random.normal(kq, (n, m), dtype=jnp.float32), axis=1)

    ref_mat = -p * (jnp.log(q) / jnp.log(2.0))
    ref_sum = ref_mat.sum(axis=1)

    out_sum = jax.block_until_ready(cont_cross_entropy(p, q, sumit=True))
    out_mat = jax.block_until_ready(cont_cross_entropy(p, q, sumit=False))
    assert out_sum.shape == (n,)
    assert out_mat.shape == (n, m)
    assert jnp.allclose(out_sum, ref_sum, atol=1e-5, rtol=1e-5)
    assert jnp.allclose(out_mat, ref_mat, atol=1e-5, rtol=1e-5)

    # Ragged shapes: exercises cdiv grids, masked partial output blocks, the
    # in-kernel column mask on the reduction path, and the megacore row split.
    n2, m2 = 20, 200
    kp2, kq2 = jax.random.split(kq)
    p2 = jax.nn.softmax(jax.random.normal(kp2, (n2, m2), dtype=jnp.float32), axis=1)
    q2 = jax.nn.softmax(jax.random.normal(kq2, (n2, m2), dtype=jnp.float32), axis=1)
    ref_mat2 = -p2 * (jnp.log(q2) / jnp.log(2.0))
    ref_sum2 = ref_mat2.sum(axis=1)

    # Auto-chosen tiles (full-width rows, >=2 row grid steps).
    out_sum2a = jax.block_until_ready(cont_cross_entropy(p2, q2, sumit=True))
    out_mat2a = jax.block_until_ready(cont_cross_entropy(p2, q2, sumit=False))
    assert out_sum2a.shape == (n2,)
    assert out_mat2a.shape == (n2, m2)
    assert jnp.allclose(out_sum2a, ref_sum2, atol=1e-5, rtol=1e-5)
    assert jnp.allclose(out_mat2a, ref_mat2, atol=1e-5, rtol=1e-5)

    # Forced small tiles: multi-step row-parallel x column-reduction grid with
    # ragged edges on both axes (column mask + masked edge writes).
    out_sum2b = jax.block_until_ready(
        cont_cross_entropy(p2, q2, sumit=True, tile_n=8, tile_m=128))
    out_mat2b = jax.block_until_ready(
        cont_cross_entropy(p2, q2, sumit=False, tile_n=8, tile_m=128))
    assert out_sum2b.shape == (n2,)
    assert out_mat2b.shape == (n2, m2)
    assert jnp.allclose(out_sum2b, ref_sum2, atol=1e-5, rtol=1e-5)
    assert jnp.allclose(out_mat2b, ref_mat2, atol=1e-5, rtol=1e-5)

    print("KERNEL_OK")
</pallas_src>

<mosaic_0001>
module attributes {stable_mosaic.version = 11 : i64} {
  func.func @kernel(%arg0: i32, %arg1: i32, %arg2: memref<8x32xf32, #tpu.memory_space<vmem>>, %arg3: memref<8x32xf32, #tpu.memory_space<vmem>>, %arg4: memref<8x1xf32, #tpu.memory_space<vmem>>, %arg5: memref<8x1xf32, #tpu.memory_space<vmem>>) attributes {dimension_semantics = [#tpu.dimension_semantics<parallel>, #tpu.dimension_semantics<arbitrary>], iteration_bounds = array<i64: 1, 1>, scalar_prefetch = 0 : i64, scratch_operands = 1 : i64, tpu.core_type = #tpu.core_type<tc>, window_params = [{transform_indices = @transform_0, window_bounds = array<i64: 8, 32>}, {transform_indices = @transform_1, window_bounds = array<i64: 8, 32>}, {transform_indices = @transform_2, window_bounds = array<i64: 8, 1>}]} {
    %c0_i32 = arith.constant 0 : i32
    %0 = arith.cmpi eq, %arg1, %c0_i32 : i32
    %1 = arith.extui %0 : i1 to i32
    %c0_i32_0 = arith.constant 0 : i32
    %2 = arith.cmpi ne, %1, %c0_i32_0 : i32
    scf.if %2 {
      %cst_10 = arith.constant 0.000000e+00 : f32
      %15 = vector.broadcast %cst_10 : f32 to vector<8x1xf32>
      %c0_11 = arith.constant 0 : index
      %c0_12 = arith.constant 0 : index
      %16 = vector.load %arg5[%c0_11, %c0_12] : memref<8x1xf32, #tpu.memory_space<vmem>>, vector<8x1xf32>
      tpu.vector_store %arg5[%c0_11, %c0_12], %15 {strides = array<i32>} : memref<8x1xf32, #tpu.memory_space<vmem>>, vector<8x1xf32>,
    } else {
    }
    %c0 = arith.constant 0 : index
    %c0_1 = arith.constant 0 : index
    %3 = vector.load %arg2[%c0, %c0_1] : memref<8x32xf32, #tpu.memory_space<vmem>>, vector<8x32xf32>
    %c0_2 = arith.constant 0 : index
    %c0_3 = arith.constant 0 : index
    %4 = vector.load %arg3[%c0_2, %c0_3] : memref<8x32xf32, #tpu.memory_space<vmem>>, vector<8x32xf32>
    %5 = math.log %4 : vector<8x32xf32>
    %6 = arith.mulf %3, %5 : vector<8x32xf32>
    %c0_4 = arith.constant 0 : index
    %c0_5 = arith.constant 0 : index
    %7 = vector.load %arg5[%c0_4, %c0_5] : memref<8x1xf32, #tpu.memory_space<vmem>>, vector<8x1xf32>
    %cst = arith.constant dense<0.000000e+00> : vector<8xf32>
    %8 = vector.multi_reduction <add>, %6, %cst [1] : vector<8x32xf32> to vector<8xf32>
    %9 = vector.shape_cast %8 : vector<8xf32> to vector<8x1xf32>
    %10 = arith.addf %7, %9 : vector<8x1xf32>
    %c0_6 = arith.constant 0 : index
    %c0_7 = arith.constant 0 : index
    %11 = vector.load %arg5[%c0_6, %c0_7] : memref<8x1xf32, #tpu.memory_space<vmem>>, vector<8x1xf32>
    tpu.vector_store %arg5[%c0_6, %c0_7], %10 {strides = array<i32>} : memref<8x1xf32, #tpu.memory_space<vmem>>, vector<8x1xf32>,
    %c0_i32_8 = arith.constant 0 : i32
    %12 = arith.cmpi eq, %arg1, %c0_i32_8 : i32
    %13 = arith.extui %12 : i1 to i32
    %c0_i32_9 = arith.constant 0 : i32
    %14 = arith.cmpi ne, %13, %c0_i32_9 : i32
    scf.if %14 {
      %c0_10 = arith.constant 0 : index
      %c0_11 = arith.constant 0 : index
      %15 = vector.load %arg5[%c0_10, %c0_11] : memref<8x1xf32, #tpu.memory_space<vmem>>, vector<8x1xf32>
      %cst_12 = arith.constant -1.44269502 : f32
      %16 = vector.broadcast %cst_12 : f32 to vector<8x1xf32>
      %17 = arith.mulf %16, %15 : vector<8x1xf32>
      %c0_13 = arith.constant 0 : index
      %c0_14 = arith.constant 0 : index
      %18 = vector.load %arg4[%c0_13, %c0_14] : memref<8x1xf32, #tpu.memory_space<vmem>>, vector<8x1xf32>
      tpu.vector_store %arg4[%c0_13, %c0_14], %17 {strides = array<i32>} : memref<8x1xf32, #tpu.memory_space<vmem>>, vector<8x1xf32>,
    } else {
    }
    return
  }
  func.func @transform_0(%arg0: i32, %arg1: i32) -> (i32, i32) {
    %c0_i32 = arith.constant 0 : i32
    return %arg0, %arg1 : i32, i32
  }
  func.func @transform_1(%arg0: i32, %arg1: i32) -> (i32, i32) {
    %c0_i32 = arith.constant 0 : i32
    return %arg0, %arg1 : i32, i32
  }
  func.func @transform_2(%arg0: i32, %arg1: i32) -> (i32, i32) {
    %c0_i32 = arith.constant 0 : i32
    %c0_i32_0 = arith.constant 0 : i32
    return %arg0, %c0_i32 : i32, i32
  }
}

</mosaic_0001>

<llo_original>
// kernel: tpu_custom_call.1
$region0: #{tpu_custom_call.1}
  #allocation0 [shape = 'u32[]', space=smem, size = 0x4, offset = 0x4, fixed_abs, tag = 'smem constant byte address 0x4 - core index']
  #allocation1 [shape = 'u32[144,128]{1,0:T(1,128)}', space=vmem, size = 0x12000, scoped, tag = 'internal scratch']
  #allocation2 [shape = 'f32[8,1]{1,0:T(8,128)}', space=vmem, size = 0x1000, scoped, tag = 'scratch operand']
  %s0 = inlined_call_operand.hbm [shape: f32[8,32], index: 0, kind: input, shape index: {}]
  %s1 = inlined_call_operand.hbm [shape: f32[8,32], index: 1, kind: input, shape index: {}]
  %s2 = inlined_call_operand.vmem [shape: f32[8,1], index: 2, kind: output, shape index: {}]
  %s3 = sld [smem:[#allocation0]]
  $region34: #{tpu_custom_call.1} parent=0
    _
  %s5 = ssub.s32 1, %s3
  %s6 = scalar_select 0, %s5, %s3
  $region1: #{tpu_custom_call.1} parent=0
    #allocation3 [shape = 'u8[4096]{0}', space=vmem, size = 0x1000, scoped, tag = 'input window, operand 0, single buffered']
    #allocation4 [shape = 's32[1]{0}', space=sflag, size = 0x4, scoped, tag = 'scoped memory for tpu_custom_call.1']
    #allocation5 [shape = 'u8[4096]{0}', space=vmem, size = 0x1000, scoped, tag = 'input window, operand 1, single buffered']
    #allocation6 [shape = 's32[1]{0}', space=sflag, size = 0x4, scoped, tag = 'scoped memory for tpu_custom_call.1']
    %7 = vsyncpa [#allocation4], 0
    %8 = vsyncpa [#allocation6], 0
    // Predicated region
    $region2: #{tpu_custom_call.1} parent=1 // pred_check
      _
    $region3: #{tpu_custom_call.1} parent=1 // pred_check_branch
      %10 = sbr.rel (0) target = $region5
    $region4: #{tpu_custom_call.1} parent=1 // pred_region
      %s12 = ssub.s32 128, 128
      %13 = vsyncadd [#allocation4], %s12
      %s15 = sshll.u32 [#allocation3], 4
      %s16 = int_to_ptr.vmem [resolvable:$true] %s15
      %18 = dma.hbm_to_vmem [thread:$0]  %s0, 128, %s16, [#allocation4]
    $region5: #{tpu_custom_call.1} parent=1 // pred_fallthru
      _
    // Predicated region
    $region6: #{tpu_custom_call.1} parent=1 // pred_check
      _
    $region7: #{tpu_custom_call.1} parent=1 // pred_check_branch
      %20 = sbr.rel (0) target = $region9
    $region8: #{tpu_custom_call.1} parent=1 // pred_region
      %s22 = ssub.s32 128, 128
      %23 = vsyncadd [#allocation6], %s22
      %s25 = sshll.u32 [#allocation5], 4
      %s26 = int_to_ptr.vmem [resolvable:$true] %s25
      %28 = dma.hbm_to_vmem [thread:$0]  %s1, 128, %s26, [#allocation6]
    $region9: #{tpu_custom_call.1} parent=1 // pred_fallthru
      _
    // Predicated region
    $region10: #{tpu_custom_call.1} parent=1 // pred_check
      _
    $region11: #{tpu_custom_call.1} parent=1 // pred_check_branch
      %30 = sbr.rel (0) target = $region13
    $region12: #{tpu_custom_call.1} parent=1 // pred_region
      %31 = dma.done [#allocation4], 128
    $region13: #{tpu_custom_call.1} parent=1 // pred_fallthru
      _
    // Predicated region
    $region14: #{tpu_custom_call.1} parent=1 // pred_check
      _
    $region15: #{tpu_custom_call.1} parent=1 // pred_check_branch
      %33 = sbr.rel (0) target = $region17
    $region16: #{tpu_custom_call.1} parent=1 // pred_region
      %34 = dma.done [#allocation6], 128
    $region17: #{tpu_custom_call.1} parent=1 // pred_fallthru
      _
    %p35 = scmp.eq.s32.totalorder 0, 0
    // Predicated region
    $region18: #{tpu_custom_call.1} parent=1 // pred_check
      %p36 = pneg %p35
    $region19: #{tpu_custom_call.1} parent=1 // pred_check_branch
      %38 = sbr.rel (%p36) target = $region21
    $region20: #{tpu_custom_call.1} parent=1 // pred_region
      %vm39 = vcmask 7168
      %40 = vst.msk [vmem:[#allocation2] sm:$0xff] %vm39, 0.0
    $region21: #{tpu_custom_call.1} parent=1 // pred_fallthru
      _
    %v41 = vld [vmem:[#allocation3] sm:$0xff]
    %v42 = vld [vmem:[#allocation5] sm:$0xff]
    %v43 = vlog2.pop %v42
    %v44 = vmul.f32 %v43, 0.6931472
    %v45 = vmul.f32 %v41, %v44
    %v46 = vld [vmem:[#allocation2] sm:$0xff]
    %vm47 = vcmask 261120
    %v48 = vsel %vm47, %v45, 0.0
    %49 = vadd.xlane.f32.xlu0 %v48
    %v50 = vpop.xlane.xlu0 %49
    %v51 = vadd.f32 %v46, %v50
    %vm52 = vcmask 7168
    %53 = vst.msk [vmem:[#allocation2] sm:$0xff] %vm52, %v51
    // Predicated region
    $region22: #{tpu_custom_call.1} parent=1 // pred_check
      %p54 = pneg %p35
    $region23: #{tpu_custom_call.1} parent=1 // pred_check_branch
      %56 = sbr.rel (%p54) target = $region25
    $region24: #{tpu_custom_call.1} parent=1 // pred_region
      %v57 = vld [vmem:[#allocation2] sm:$0xff]
      %v58 = vmul.f32 %v57, -1.442695
      %59 = vst.msk [vmem:[%s2] sm:$0xff] %vm52, %v58
    $region25: #{tpu_custom_call.1} parent=1 // pred_fallthru
      _
    // Predicated region
    $region26: #{tpu_custom_call.1} parent=1 // pred_check
      _
    $region27: #{tpu_custom_call.1} parent=1 // pred_check_branch
      %61 = sbr.rel (0) target = $region29
    $region28: #{tpu_custom_call.1} parent=1 // pred_region
      _
    $region29: #{tpu_custom_call.1} parent=1 // pred_fallthru
      _
    // Predicated region
    $region30: #{tpu_custom_call.1} parent=1 // pred_check
      _
    $region31: #{tpu_custom_call.1} parent=1 // pred_check_branch
      %63 = sbr.rel (0) target = $region33
    $region32: #{tpu_custom_call.1} parent=1 // pred_region
      _
    $region33: #{tpu_custom_call.1} parent=1 // pred_fallthru
      _
    %64 = vsyncpa [#allocation4], 1
    %65 = vsyncpa [#allocation6], 1

</llo_original>
